<compile_context>
chip_gen: v6e
topology: v6e:2x2x1
jax: 0.10.0
libtpu: 0.0.40
codegen_flags: <defaults>
</compile_context>

<pallas_src>
import jax
import jax.numpy as jnp
from jax.experimental import pallas as pl
from jax.experimental.pallas import tpu as pltpu


def _round_up(x, m):
    return ((x + m - 1) // m) * m


def _round_down(x, m):
    return (x // m) * m


def _mhd_kernel(x_ref, w_ref, o_ref):
    # x_ref: (tm, D) compute dtype, w_ref: (D, tn), o_ref: (tm, tn) out dtype.
    o_ref[...] = jnp.dot(
        x_ref[...], w_ref[...], preferred_element_type=jnp.float32
    ).astype(o_ref.dtype)


def multi_head_dense(x, weight, *, tm=1024, tn=512,
                     compute_dtype=jnp.bfloat16,
                     vmem_tile_budget_bytes=40 * 1024 * 1024):
    """y[b] = x[b] @ weight for every batch element (MultiHeadDense.forward).

    x: (B, N, D), weight: (D, D)  ->  (B, N, D) in x.dtype.
    """
    B, N, D = x.shape
    assert weight.shape == (D, D), "weight must be (d, d)"
    out_dtype = x.dtype

    # Fold the batch into rows: bmm with a repeated weight is one big matmul.
    M = B * N
    x2 = x.reshape(M, D)

    # MXU-native compute dtype; accumulation stays f32.
    # TODO(synk): for bit-parity with torch.bmm pass compute_dtype=jnp.float32
    # and request Precision.HIGHEST (3-6x MXU cost, still memory-bound).
    if x2.dtype != compute_dtype:
        x2 = x2.astype(compute_dtype)
    w = weight if weight.dtype == compute_dtype else weight.astype(compute_dtype)

    cbytes = jnp.dtype(compute_dtype).itemsize
    obytes = jnp.dtype(out_dtype).itemsize

    # Output-column (weight N) tiling only once the full weight would be big.
    if D % 128 == 0 and D * D * cbytes > 4 * 1024 * 1024:
        tn = min(max(_round_down(tn, 128), 128), D)
    else:
        tn = D

    # ---- Row-tile selection -------------------------------------------------
    g = 16  # sublane granularity for packed bf16 (also a multiple of 8 for f32)
    tm_cap_problem = _round_up(M, g)                     # never exceed problem
    tm_cap_mcore = max(g, _round_up(pl.cdiv(M, 2), g))   # keep >=2 steps (v7x)
    w_bytes = D * tn * cbytes
    per_row_bytes = 2 * D * cbytes + 2 * tn * obytes     # dbl-buffered in + out
    tm_cap_vmem = max(g, _round_down(
        (vmem_tile_budget_bytes - 2 * w_bytes) // per_row_bytes, g))
    tm = max(g, min(_round_up(tm, g), tm_cap_problem, tm_cap_mcore, tm_cap_vmem))

    grid = (pl.cdiv(M, tm), pl.cdiv(D, tn))

    needed_vmem = 2 * tm * D * cbytes + 2 * tm * tn * obytes + 2 * w_bytes
    vmem_limit = int(min(max(needed_vmem + (4 << 20), 32 << 20), 48 << 20))

    cost = pl.CostEstimate(
        flops=2 * M * D * D,
        transcendentals=0,
        bytes_accessed=M * D * (cbytes + obytes) + D * D * cbytes,
    )

    def call(single_buffer_weight):
        if single_buffer_weight:
            # Constant block: no re-DMA, and don't reserve a dead 2nd buffer.
            w_spec = pl.BlockSpec((D, tn), lambda i, j: (0, j),
                                  pipeline_mode=pl.Buffered(1))
        else:
            w_spec = pl.BlockSpec((D, tn), lambda i, j: (0, j))
        return pl.pallas_call(
            _mhd_kernel,
            out_shape=jax.ShapeDtypeStruct((M, D), out_dtype),
            grid=grid,
            in_specs=[
                # Activations: lane-dense (tm, D) row tile, reused across j.
                pl.BlockSpec((tm, D), lambda i, j: (i, 0)),
                w_spec,
            ],
            out_specs=pl.BlockSpec((tm, tn), lambda i, j: (i, j)),
            compiler_params=pltpu.CompilerParams(
                dimension_semantics=("parallel", "parallel"),
                vmem_limit_bytes=vmem_limit,
            ),
            cost_estimate=cost,
        )(x2, w)

    try:
        out = call(single_buffer_weight=True)
    except Exception:
        # Fallback if pl.Buffered(1) is rejected by this jax/libtpu build.
        out = call(single_buffer_weight=False)

    return out.reshape(B, N, D)


def init_weight(key, d):
    # torch.nn.init.kaiming_uniform_(w, a=sqrt(5)) on a (d, d) weight:
    # gain = sqrt(2 / (1 + 5)) = sqrt(1/3), fan_in = d,
    # bound = gain * sqrt(3 / fan_in) = 1 / sqrt(d)  ->  U(-1/sqrt(d), 1/sqrt(d))
    bound = 1.0 / (d ** 0.5)
    return jax.random.uniform(key, (d, d), jnp.float32, -bound, bound)


def _check(B, WH, D, key):
    kx, kw = jax.random.split(key)
    x = jax.random.normal(kx, (B, WH, D), jnp.float32)
    w = init_weight(kw, D)

    out = jax.block_until_ready(multi_head_dense(x, w))
    assert out.shape == (B, WH, D) and out.dtype == x.dtype

    # Pure-JAX full-precision reference (same broadcast-weight bmm).
    ref = jnp.einsum("bnd,de->bne", x, w, precision=jax.lax.Precision.HIGHEST)
    # bf16 operand quantization bounds the error well below this tolerance.
    err = float(jnp.max(jnp.abs(out - ref)))
    assert err < 2e-2, f"max abs error too large: {err}"


if __name__ == "__main__":
    key = jax.random.PRNGKey(0)
    k0, k1 = jax.random.split(key)
    # Small shapes consistent with the module: b=2, wh=16*16 tokens, d=128.
    _check(2, 256, 128, k0)
    # Ragged M (B*N not a multiple of the row tile) exercises masked stores.
    _check(2, 200, 128, k1)
    print("KERNEL_OK")
</pallas_src>

<mosaic_0001>
module attributes {stable_mosaic.version = 11 : i64} {
  func.func @_mhd_kernel(%arg0: i32, %arg1: i32, %arg2: memref<256x128xbf16, #tpu.memory_space<vmem>>, %arg3: memref<128x128xbf16, #tpu.memory_space<vmem>>, %arg4: memref<256x128xf32, #tpu.memory_space<vmem>>) attributes {dimension_semantics = [#tpu.dimension_semantics<parallel>, #tpu.dimension_semantics<parallel>], iteration_bounds = array<i64: 2, 1>, scalar_prefetch = 0 : i64, scratch_operands = 0 : i64, tpu.core_type = #tpu.core_type<tc>, window_params = [{transform_indices = @transform_0, window_bounds = array<i64: 256, 128>}, {pipeline_mode = #tpu.pipeline_mode<synchronous>, transform_indices = @transform_1, window_bounds = array<i64: 128, 128>}, {transform_indices = @transform_2, window_bounds = array<i64: 256, 128>}]} {
    %c0 = arith.constant 0 : index
    %c0_0 = arith.constant 0 : index
    %0 = vector.load %arg2[%c0, %c0_0] : memref<256x128xbf16, #tpu.memory_space<vmem>>, vector<256x128xbf16>
    %c0_1 = arith.constant 0 : index
    %c0_2 = arith.constant 0 : index
    %1 = vector.load %arg3[%c0_1, %c0_2] : memref<128x128xbf16, #tpu.memory_space<vmem>>, vector<128x128xbf16>
    %cst = arith.constant dense<0.000000e+00> : vector<256x128xf32>
    %2 = tpu.matmul %0, %1, %cst {dimension_numbers = #tpu.dot_dimension_numbers<[1], [0], [0], [1], [0, 0, 1, 1], [], []>} : vector<256x128xbf16>, vector<128x128xbf16>, vector<256x128xf32> -> vector<256x128xf32>
    %c0_3 = arith.constant 0 : index
    %c0_4 = arith.constant 0 : index
    %3 = vector.load %arg4[%c0_3, %c0_4] : memref<256x128xf32, #tpu.memory_space<vmem>>, vector<256x128xf32>
    tpu.vector_store %arg4[%c0_3, %c0_4], %2 {strides = array<i32>} : memref<256x128xf32, #tpu.memory_space<vmem>>, vector<256x128xf32>,
    return
  }
  func.func @transform_0(%arg0: i32, %arg1: i32) -> (i32, i32) {
    %c0_i32 = arith.constant 0 : i32
    %c0_i32_0 = arith.constant 0 : i32
    return %arg0, %c0_i32 : i32, i32
  }
  func.func @transform_1(%arg0: i32, %arg1: i32) -> (i32, i32) {
    %c0_i32 = arith.constant 0 : i32
    %c0_i32_0 = arith.constant 0 : i32
    return %c0_i32, %arg1 : i32, i32
  }
  func.func @transform_2(%arg0: i32, %arg1: i32) -> (i32, i32) {
    %c0_i32 = arith.constant 0 : i32
    return %arg0, %arg1 : i32, i32
  }
}

module attributes {stable_mosaic.version = 11 : i64} {
  func.func @_mhd_kernel(%arg0: i32, %arg1: i32, %arg2: memref<256x128xbf16, #tpu.memory_space<vmem>>, %arg3: memref<128x128xbf16, #tpu.memory_space<vmem>>, %arg4: memref<256x128xf32, #tpu.memory_space<vmem>>) attributes {dimension_semantics = [#tpu.dimension_semantics<parallel>, #tpu.dimension_semantics<parallel>], iteration_bounds = array<i64: 2, 1>, scalar_prefetch = 0 : i64, scratch_operands = 0 : i64, tpu.core_type = #tpu.core_type<tc>, window_params = [{transform_indices = @transform_0, window_bounds = array<i64: 256, 128>}, {transform_indices = @transform_1, window_bounds = array<i64: 128, 128>}, {transform_indices = @transform_2, window_bounds = array<i64: 256, 128>}]} {
    %c0 = arith.constant 0 : index
    %c0_0 = arith.constant 0 : index
    %0 = vector.load %arg2[%c0, %c0_0] : memref<256x128xbf16, #tpu.memory_space<vmem>>, vector<256x128xbf16>
    %c0_1 = arith.constant 0 : index
    %c0_2 = arith.constant 0 : index
    %1 = vector.load %arg3[%c0_1, %c0_2] : memref<128x128xbf16, #tpu.memory_space<vmem>>, vector<128x128xbf16>
    %cst = arith.constant dense<0.000000e+00> : vector<256x128xf32>
    %2 = tpu.matmul %0, %1, %cst {dimension_numbers = #tpu.dot_dimension_numbers<[1], [0], [0], [1], [0, 0, 1, 1], [], []>} : vector<256x128xbf16>, vector<128x128xbf16>, vector<256x128xf32> -> vector<256x128xf32>
    %c0_3 = arith.constant 0 : index
    %c0_4 = arith.constant 0 : index
    %3 = vector.load %arg4[%c0_3, %c0_4] : memref<256x128xf32, #tpu.memory_space<vmem>>, vector<256x128xf32>
    tpu.vector_store %arg4[%c0_3, %c0_4], %2 {strides = array<i32>} : memref<256x128xf32, #tpu.memory_space<vmem>>, vector<256x128xf32>,
    return
  }
  func.func @transform_0(%arg0: i32, %arg1: i32) -> (i32, i32) {
    %c0_i32 = arith.constant 0 : i32
    %c0_i32_0 = arith.constant 0 : i32
    return %arg0, %c0_i32 : i32, i32
  }
  func.func @transform_1(%arg0: i32, %arg1: i32) -> (i32, i32) {
    %c0_i32 = arith.constant 0 : i32
    %c0_i32_0 = arith.constant 0 : i32
    return %c0_i32, %arg1 : i32, i32
  }
  func.func @transform_2(%arg0: i32, %arg1: i32) -> (i32, i32) {
    %c0_i32 = arith.constant 0 : i32
    return %arg0, %arg1 : i32, i32
  }
}

</mosaic_0001>

<llo_original>
// kernel: tpu_custom_call.1
$region0: #{tpu_custom_call.1}
  #allocation0 [shape = 'u32[]', space=smem, size = 0x4, offset = 0x4, fixed_abs, tag = 'smem constant byte address 0x4 - core index']
  #allocation1 [shape = 'u32[144,128]{1,0:T(1,128)}', space=vmem, size = 0x12000, scoped, tag = 'internal scratch']
  %s0 = inlined_call_operand.hbm [shape: bf16[512,128], index: 0, kind: input, shape index: {}]
  %s1 = inlined_call_operand.hbm [shape: bf16[128,128], index: 1, kind: input, shape index: {}]
  %s2 = inlined_call_operand.hbm [shape: f32[512,128], index: 2, kind: output, shape index: {}]
  %s3 = sld [smem:[#allocation0]]
  $region49: #{tpu_custom_call.1} parent=0
    _
  %s5 = ssub.s32 1, %s3
  %s6 = scalar_select 0, %s5, %s3
  $region1: #{tpu_custom_call.1} parent=0
    #allocation2 [shape = 'u8[131072]{0}', space=vmem, size = 0x20000, scoped, tag = 'input window, operand 0']
    #allocation3 [shape = 's32[2]{0}', space=sflag, size = 0x8, scoped, tag = 'scoped memory for tpu_custom_call.1']
    #allocation4 [shape = 's32[2]{0}', space=sflag, size = 0x8, scoped, tag = 'scoped memory for tpu_custom_call.1']
    #allocation5 [shape = 'u8[32768]{0}', space=vmem, size = 0x8000, scoped, tag = 'input window, operand 1, single buffered']
    #allocation6 [shape = 's32[1]{0}', space=sflag, size = 0x4, scoped, tag = 'scoped memory for tpu_custom_call.1']
    #allocation7 [shape = 'u8[262144]{0}', space=vmem, size = 0x40000, scoped, tag = 'output window, operand 0']
    %7 = vsyncpa [#allocation3], 0
    %s8 = scalar_lea.sflag [#allocation3], 1
    %9 = vsyncpa %s8, 0
    %10 = vsyncpa [#allocation6], 0
    %11 = vsyncpa [#allocation4], 0
    %s12 = scalar_lea.sflag [#allocation4], 1
    %13 = vsyncpa %s12, 0
    loop: start=0, step=1, limit=4
    $region2: #{tpu_custom_call.1} parent=1 // loop_pre_header
      _
    $region3: #{tpu_custom_call.1} parent=1 // loop_header
      %s15 = sphi 0, %s19
      %p16 = scmp.ge.s32.totalorder %s15, 4
      %s22 = sphi 0, %s34
      %s23 = sphi 0, %s30
      %s24 = sphi 0, %s22
      %s25 = sphi 0, %s23
      %s26 = sphi 0, %s24
      %s27 = sphi 0, %s25
      %s37 = sphi 0, %s39
      %s40 = sphi 0, %s37
      %s41 = sphi 0, %s40
      %s57 = sphi 0, %s41
      %s63 = sphi 0, %s65
      %s66 = sphi 0, %s63
      %s67 = sphi 0, %s66
      %s83 = sphi 0, %s67
      %s91 = sphi 0, %s93
      %s94 = sphi 0, %s91
      %s95 = sphi 0, %s94
      %s111 = sphi 0, %s95
    $region4: #{tpu_custom_call.1} parent=1 // loop_header_branch
      %18 = sbr.rel (%p16) target = $region8
    $region5: #{tpu_custom_call.1} parent=1 // loop_body
      %s20 = ssub.s32 %s15, 1
      %s21 = ssub.s32 %s15, 2
      %s28 = sadd.s32 1, %s23
      %p29 = scmp.ge.s32.totalorder %s28, 1
      %s30 = scalar_select %p29, 0, %s28
      %s31 = sadd.s32 1, %s22
      %s32 = scalar_select %p29, %s31, %s22
      %p33 = scmp.ge.s32.totalorder %s32, 2
      %s34 = scalar_select %p33, 0, %s32
      %s35 = ssub.s32 %s22, %s34
      %p36 = scmp.eq.s32.totalorder %s35, 0
      %s38 = sadd.s32 %s37, 1
      %s39 = scalar_select %p36, %s37, %s38
      %p42 = pneg %p36
      %p43 = scmp.eq.s32.totalorder %s15, 1
      %p44 = por %p42, %p43
      %p45 = scmp.ne.s32.totalorder %s37, %s40
      %p46 = scmp.eq.s32.totalorder %s15, 0
      %p47 = por %p45, %p46
      %p48 = scmp.ne.s32.totalorder %s37, %s40
      %p49 = scmp.eq.s32.totalorder %s20, 1
      %p50 = por %p48, %p49
      %p51 = scmp.ne.s32.totalorder %s40, %s41
      %p52 = scmp.eq.s32.totalorder %s20, 0
      %p53 = por %p51, %p52
      %p54 = scmp.ne.s32.totalorder %s40, %s41
      %p55 = scmp.eq.s32.totalorder %s21, 1
      %p56 = por %p54, %p55
      %p58 = scmp.ne.s32.totalorder %s41, %s57
      %p59 = scmp.eq.s32.totalorder %s21, 0
      %p60 = por %p58, %p59
      %s61 = ssub.s32 %s23, %s30
      %p62 = scmp.eq.s32.totalorder %s61, 0
      %s64 = sadd.s32 %s63, 1
      %s65 = scalar_select %p62, %s63, %s64
      %p68 = pneg %p62
      %p69 = scmp.eq.s32.totalorder %s15, 1
      %p70 = por %p68, %p69
      %p71 = scmp.ne.s32.totalorder %s63, %s66
      %p72 = scmp.eq.s32.totalorder %s15, 0
      %p73 = por %p71, %p72
      %p74 = scmp.ne.s32.totalorder %s63, %s66
      %p75 = scmp.eq.s32.totalorder %s20, 1
      %p76 = por %p74, %p75
      %p77 = scmp.ne.s32.totalorder %s66, %s67
      %p78 = scmp.eq.s32.totalorder %s20, 0
      %p79 = por %p77, %p78
      %p80 = scmp.ne.s32.totalorder %s66, %s67
      %p81 = scmp.eq.s32.totalorder %s21, 1
      %p82 = por %p80, %p81
      %p84 = scmp.ne.s32.totalorder %s67, %s83
      %p85 = scmp.eq.s32.totalorder %s21, 0
      %p86 = por %p84, %p85
      %s87 = ssub.s32 %s22, %s34
      %s88 = ssub.s32 %s23, %s30
      %s89 = sor.u32 %s87, %s88
      %p90 = scmp.eq.s32.totalorder %s89, 0
      %s92 = sadd.s32 %s91, 1
      %s93 = scalar_select %p90, %s91, %s92
      %p96 = pneg %p90
      %p97 = scmp.eq.s32.totalorder %s15, 1
      %p98 = por %p96, %p97
      %p99 = scmp.ne.s32.totalorder %s91, %s94
      %p100 = scmp.eq.s32.totalorder %s15, 0
      %p101 = por %p99, %p100
      %p102 = scmp.ne.s32.totalorder %s91, %s94
      %p103 = scmp.eq.s32.totalorder %s20, 1
      %p104 = por %p102, %p103
      %p105 = scmp.ne.s32.totalorder %s94, %s95
      %p106 = scmp.eq.s32.totalorder %s20, 0
      %p107 = por %p105, %p106
      %p108 = scmp.ne.s32.totalorder %s94, %s95
      %p109 = scmp.eq.s32.totalorder %s21, 1
      %p110 = por %p108, %p109
      %p112 = scmp.ne.s32.totalorder %s95, %s111
      %p113 = scmp.eq.s32.totalorder %s21, 0
      %p114 = por %p112, %p113
      %p115 = scmp.le.s32.totalorder 1, %s15
      %p116 = scmp.lt.s32.totalorder %s15, 3
      %p117 = pnand %p115, %p116
      %p118 = pneg %p117
      // Predicated region
      $region9: #{tpu_custom_call.1} parent=5 // pred_check
        _
      $region10: #{tpu_custom_call.1} parent=5 // pred_check_branch
        %120 = sbr.rel (%p117) target = $region12
      $region11: #{tpu_custom_call.1} parent=5 // pred_region
        %s121 = ssub.s32 %s15, 1
        // Predicated region
        $region13: #{tpu_custom_call.1} parent=11 // pred_check
          %p122 = pneg %p79
        $region14: #{tpu_custom_call.1} parent=11 // pred_check_branch
          %124 = sbr.rel (%p122) target = $region16
        $region15: #{tpu_custom_call.1} parent=11 // pred_region
          %s126 = ssub.s32 1024, 1024
          %127 = vsyncadd [#allocation6], %s126
          %s128 = smul.addr %s25, 64
          %s129 = scalar_lea.hbm %s1, %s128
          %s130 = sshll.u32 [#allocation5], 4
          %s131 = int_to_ptr.vmem [resolvable:$true] %s130
          %136 = dma.hbm_to_vmem [thread:$0]  %s129, 1024, %s131, [#allocation6], 64, 64, 4
        $region16: #{tpu_custom_call.1} parent=11 // pred_fallthru
          _
      $region12: #{tpu_custom_call.1} parent=5 // pred_fallthru
        _
      %p137 = scmp.lt.s32.totalorder %s15, 2
      // Predicated region
      $region17: #{tpu_custom_call.1} parent=5 // pred_check
        %p138 = pneg %p137
      $region18: #{tpu_custom_call.1} parent=5 // pred_check_branch
        %140 = sbr.rel (%p138) target = $region20
      $region19: #{tpu_custom_call.1} parent=5 // pred_region
        // Predicated region
        $region21: #{tpu_custom_call.1} parent=19 // pred_check
          %p141 = pneg %p47
        $region22: #{tpu_custom_call.1} parent=19 // pred_check_branch
          %143 = sbr.rel (%p141) target = $region24
        $region23: #{tpu_custom_call.1} parent=19 // pred_region
          %s144 = sand.u32 %s37, 1
          %s145 = scalar_lea.sflag [#allocation3], %s144
          %s146 = sand.u32 %s37, 1
          %s147 = smul.addr %s146, 128
          %s148 = scalar_lea.vmem [#allocation2], %s147
          %s149 = smul.u32 32, %s22
          %s151 = ssub.s32 2048, 2048
          %152 = vsyncadd %s145, %s151
          %s153 = smul.addr %s149, 64
          %s154 = scalar_lea.hbm %s0, %s153
          %s155 = sshll.u32 %s148, 4
          %s156 = int_to_ptr.vmem [resolvable:$true] %s155
          %161 = dma.hbm_to_vmem [thread:$0]  %s154, 2048, %s156, %s145, 64, 64, 4
        $region24: #{tpu_custom_call.1} parent=19 // pred_fallthru
          _
      $region20: #{tpu_custom_call.1} parent=5 // pred_fallthru
        _
      %p162 = scmp.le.s32.totalorder 1, %s15
      %p163 = scmp.lt.s32.totalorder %s15, 3
      %p164 = pnand %p162, %p163
      %p165 = pneg %p164
      // Predicated region
      $region25: #{tpu_custom_call.1} parent=5 // pred_check
        _
      $region26: #{tpu_custom_call.1} parent=5 // pred_check_branch
        %167 = sbr.rel (%p164) target = $region28
      $region27: #{tpu_custom_call.1} parent=5 // pred_region
        %s168 = ssub.s32 %s15, 1
        %s169 = sand.u32 %s40, 1
        %s170 = scalar_lea.sflag [#allocation3], %s169
        %s171 = sand.u32 %s40, 1
        %s172 = smul.addr %s171, 128
        %s173 = scalar_lea.vmem [#allocation2], %s172
        // Predicated region
        $region29: #{tpu_custom_call.1} parent=27 // pred_check
          %p174 = pneg %p53
        $region30: #{tpu_custom_call.1} parent=27 // pred_check_branch
          %176 = sbr.rel (%p174) target = $region32
        $region31: #{tpu_custom_call.1} parent=27 // pred_region
          %177 = dma.done %s170, 2048
        $region32: #{tpu_custom_call.1} parent=27 // pred_fallthru
          _
        // Predicated region
        $region33: #{tpu_custom_call.1} parent=27 // pred_check
          %p178 = pneg %p79
        $region34: #{tpu_custom_call.1} parent=27 // pred_check_branch
          %180 = sbr.rel (%p178) target = $region36
        $region35: #{tpu_custom_call.1} parent=27 // pred_region
          %181 = dma.done [#allocation6], 1024
        $region36: #{tpu_custom_call.1} parent=27 // pred_fallthru
          _
        %s182 = sand.u32 %s40, 1
        %s183 = scalar_lea.sflag [#allocation3], %s182
        %s184 = sand.u32 %s40, 1
        %s185 = smul.addr %s184, 128
        %s186 = scalar_lea.vmem [#allocation2], %s185
        %p187 = pneg %p53
        %p188 = pneg %p50
        %p189 = pneg %p79
        %p190 = pneg %p76
        %p191 = pneg %p107
        %p192 = pneg %p104
        %s193 = sand.u32 %s94, 1
        %s194 = scalar_lea.sflag [#allocation4], %s193
        %s195 = sand.u32 %s94, 1
        %s196 = smul.addr %s195, 256
        %s197 = scalar_lea.vmem [#allocation7], %s196
        %s198 = smul.u32 32, %s24
        %s199 = smul.u32 32, %s24
        %v201 = vld [vmem:[%s173] sm:$0xf]
        %v202 = vld [vmem:[%s173 + $0x4] sm:$0xf]
        %v203 = vld [vmem:[%s173 + $0x8] sm:$0xf]
        %v204 = vld [vmem:[%s173 + $0xc] sm:$0xf]
        %v205 = vld [vmem:[%s173 + $0x10] sm:$0xf]
        %v206 = vld [vmem:[%s173 + $0x14] sm:$0xf]
        %v207 = vld [vmem:[%s173 + $0x18] sm:$0xf]
        %v208 = vld [vmem:[%s173 + $0x1c] sm:$0xf]
        %v209 = vld [vmem:[%s173 + $0x20] sm:$0xf]
        %v210 = vld [vmem:[%s173 + $0x24] sm:$0xf]
        %v211 = vld [vmem:[%s173 + $0x28] sm:$0xf]
        %v212 = vld [vmem:[%s173 + $0x2c] sm:$0xf]
        %v213 = vld [vmem:[%s173 + $0x30] sm:$0xf]
        %v214 = vld [vmem:[%s173 + $0x34] sm:$0xf]
        %v215 = vld [vmem:[%s173 + $0x38] sm:$0xf]
        %v216 = vld [vmem:[%s173 + $0x3c] sm:$0xf]
        %v217 = vld [vmem:[%s173 + $0x40] sm:$0xf]
        %v218 = vld [vmem:[%s173 + $0x44] sm:$0xf]
        %v219 = vld [vmem:[%s173 + $0x48] sm:$0xf]
        %v220 = vld [vmem:[%s173 + $0x4c] sm:$0xf]
        %v221 = vld [vmem:[%s173 + $0x50] sm:$0xf]
        %v222 = vld [vmem:[%s173 + $0x54] sm:$0xf]
        %v223 = vld [vmem:[%s173 + $0x58] sm:$0xf]
        %v224 = vld [vmem:[%s173 + $0x5c] sm:$0xf]
        %v225 = vld [vmem:[%s173 + $0x60] sm:$0xf]
        %v226 = vld [vmem:[%s173 + $0x64] sm:$0xf]
        %v227 = vld [vmem:[%s173 + $0x68] sm:$0xf]
        %v228 = vld [vmem:[%s173 + $0x6c] sm:$0xf]
        %v229 = vld [vmem:[%s173 + $0x70] sm:$0xf]
        %v230 = vld [vmem:[%s173 + $0x74] sm:$0xf]
        %v231 = vld [vmem:[%s173 + $0x78] sm:$0xf]
        %v232 = vld [vmem:[%s173 + $0x7c] sm:$0xf]
        %v233 = vld [vmem:[#allocation5] sm:$0xf]
        %v234 = vld [vmem:[#allocation5 + $0x4] sm:$0xf]
        %v235 = vld [vmem:[#allocation5 + $0x8] sm:$0xf]
        %v236 = vld [vmem:[#allocation5 + $0xc] sm:$0xf]
        %v237 = vld [vmem:[#allocation5 + $0x10] sm:$0xf]
        %v238 = vld [vmem:[#allocation5 + $0x14] sm:$0xf]
        %v239 = vld [vmem:[#allocation5 + $0x18] sm:$0xf]
        %v240 = vld [vmem:[#allocation5 + $0x1c] sm:$0xf]
        %v241 = vld [vmem:[#allocation5 + $0x20] sm:$0xf]
        %v242 = vld [vmem:[#allocation5 + $0x24] sm:$0xf]
        %v243 = vld [vmem:[#allocation5 + $0x28] sm:$0xf]
        %v244 = vld [vmem:[#allocation5 + $0x2c] sm:$0xf]
        %v245 = vld [vmem:[#allocation5 + $0x30] sm:$0xf]
        %v246 = vld [vmem:[#allocation5 + $0x34] sm:$0xf]
        %v247 = vld [vmem:[#allocation5 + $0x38] sm:$0xf]
        %v248 = vld [vmem:[#allocation5 + $0x3c] sm:$0xf]
        %v281 = vunpack.c.l.b16 %v201
        %v282 = vunpack.c.l.b16 %v202
        %v283 = vunpack.c.l.b16 %v203
        %v284 = vunpack.c.l.b16 %v204
        %v285 = vunpack.c.l.b16 %v205
        %v286 = vunpack.c.l.b16 %v206
        %v287 = vunpack.c.l.b16 %v207
        %v288 = vunpack.c.l.b16 %v208
        %v289 = vunpack.c.l.b16 %v209
        %v290 = vunpack.c.l.b16 %v210
        %v291 = vunpack.c.l.b16 %v211
        %v292 = vunpack.c.l.b16 %v212
        %v293 = vunpack.c.l.b16 %v213
        %v294 = vunpack.c.l.b16 %v214
        %v295 = vunpack.c.l.b16 %v215
        %v296 = vunpack.c.l.b16 %v216
        %v297 = vunpack.c.l.b16 %v217
        %v298 = vunpack.c.l.b16 %v218
        %v299 = vunpack.c.l.b16 %v219
        %v300 = vunpack.c.l.b16 %v220
        %v301 = vunpack.c.l.b16 %v221
        %v302 = vunpack.c.l.b16 %v222
        %v303 = vunpack.c.l.b16 %v223
        %v304 = vunpack.c.l.b16 %v224
        %v305 = vunpack.c.l.b16 %v225
        %v306 = vunpack.c.l.b16 %v226
        %v307 = vunpack.c.l.b16 %v227
        %v308 = vunpack.c.l.b16 %v228
        %v309 = vunpack.c.l.b16 %v229
        %v310 = vunpack.c.l.b16 %v230
        %v311 = vunpack.c.l.b16 %v231
        %v312 = vunpack.c.l.b16 %v232
        %v313 = vpack.c.b16 %v282, %v281
        %v314 = vpack.c.b16 %v284, %v283
        %v315 = vpack.c.b16 %v286, %v285
        %v316 = vpack.c.b16 %v288, %v287
        %v317 = vpack.c.b16 %v290, %v289
        %v318 = vpack.c.b16 %v292, %v291
        %v319 = vpack.c.b16 %v294, %v293
        %v320 = vpack.c.b16 %v296, %v295
        %v321 = vpack.c.b16 %v298, %v297
        %v322 = vpack.c.b16 %v300, %v299
        %v323 = vpack.c.b16 %v302, %v301
        %v324 = vpack.c.b16 %v304, %v303
        %v325 = vpack.c.b16 %v306, %v305
        %v326 = vpack.c.b16 %v308, %v307
        %v327 = vpack.c.b16 %v310, %v309
        %v328 = vpack.c.b16 %v312, %v311
        %v361 = vunpack.c.l.b16 %v233
        %v362 = vunpack.c.l.b16 %v234
        %v363 = vunpack.c.l.b16 %v235
        %v364 = vunpack.c.l.b16 %v236
        %v365 = vunpack.c.l.b16 %v237
        %v366 = vunpack.c.l.b16 %v238
        %v367 = vunpack.c.l.b16 %v239
        %v368 = vunpack.c.l.b16 %v240
        %v369 = vunpack.c.l.b16 %v241
        %v370 = vunpack.c.l.b16 %v242
        %v371 = vunpack.c.l.b16 %v243
        %v372 = vunpack.c.l.b16 %v244
        %v373 = vunpack.c.l.b16 %v245
        %v374 = vunpack.c.l.b16 %v246
        %v375 = vunpack.c.l.b16 %v247
        %v376 = vunpack.c.l.b16 %v248
        %v377 = vpack.c.b16 %v362, %v361
        %v378 = vpack.c.b16 %v364, %v363
        %v379 = vpack.c.b16 %v366, %v365
        %v380 = vpack.c.b16 %v368, %v367
        %v381 = vpack.c.b16 %v370, %v369
        %v382 = vpack.c.b16 %v372, %v371
        %v383 = vpack.c.b16 %v374, %v373
        %v384 = vpack.c.b16 %v376, %v375
        %393 = vmatprep.subr.bf16.mxu0 0
        %394 = vmatpush1.bf16.msra.mxu0 %v384
        %395 = vmatprep.subr.bf16.mxu0 0
        %396 = vmatpush1.bf16.msra.mxu0 %v383
        %397 = vmatprep.subr.bf16.mxu0 0
        %398 = vmatpush1.bf16.msra.mxu0 %v382
        %399 = vmatprep.subr.bf16.mxu0 0
        %400 = vmatpush1.bf16.msra.mxu0 %v381
        %401 = vmatprep.subr.bf16.mxu0 0
        %402 = vmatpush1.bf16.msra.mxu0 %v380
        %403 = vmatprep.subr.bf16.mxu0 0
        %404 = vmatpush1.bf16.msra.mxu0 %v379
        %405 = vmatprep.subr.bf16.mxu0 0
        %406 = vmatpush1.bf16.msra.mxu0 %v378
        %407 = vmatprep.subr.bf16.mxu0 0
        %408 = vmatpush1.bf16.msra.mxu0 %v377
        %409 = vmatprep.subr.bf16.mxu0 0
        %410 = vmatpush2.bf16.msra.mxu0 0
        %411 = vmatprep.subr.bf16.mxu0 0
        %412 = vmatpush2.bf16.msra.mxu0 0
        %413 = vmatprep.subr.bf16.mxu0 0
        %414 = vmatpush2.bf16.msra.mxu0 0
        %415 = vmatprep.subr.bf16.mxu0 0
        %416 = vmatpush2.bf16.msra.mxu0 0
        %417 = vmatprep.subr.bf16.mxu0 0
        %418 = vmatpush2.bf16.msra.mxu0 0
        %419 = vmatprep.subr.bf16.mxu0 0
        %420 = vmatpush2.bf16.msra.mxu0 0
        %421 = vmatprep.subr.bf16.mxu0 0
        %422 = vmatpush2.bf16.msra.mxu0 0
        %423 = vmatprep.subr.bf16.mxu0 0
        %424 = vmatpush2.bf16.msra.mxu0 0
        %425 = vmatprep.mubr.bf16.mxu0 0
        %426 = vmatmul.mubr.bf16.gmra.mxu0 %v313
        %v427 = vpop.f32.mrf.mxu0
        %v428 = vadd.f32 0.0, %v427
        %v429 = vpop.f32.mrf.mxu0
        %v430 = vpop.f32.mrf.mxu0
        %v431 = vadd.f32 0.0, %v430
        %v432 = vpop.f32.mrf.mxu0
        %433 = vmatprep.mubr.bf16.mxu0 0
        %434 = vmatmul.mubr.bf16.gmra.mxu0 %v314
        %v435 = vpop.f32.mrf.mxu0
        %v436 = vadd.f32 0.0, %v435
        %v437 = vpop.f32.mrf.mxu0
        %v438 = vpop.f32.mrf.mxu0
        %v439 = vadd.f32 0.0, %v438
        %v440 = vpop.f32.mrf.mxu0
        %441 = vmatprep.mubr.bf16.mxu0 0
        %442 = vmatmul.mubr.bf16.gmra.mxu0 %v315
        %v443 = vpop.f32.mrf.mxu0
        %v444 = vadd.f32 0.0, %v443
        %v445 = vpop.f32.mrf.mxu0
        %v446 = vpop.f32.mrf.mxu0
        %v447 = vadd.f32 0.0, %v446
        %v448 = vpop.f32.mrf.mxu0
        %449 = vmatprep.mubr.bf16.mxu0 0
        %450 = vmatmul.mubr.bf16.gmra.mxu0 %v316
        %v451 = vpop.f32.mrf.mxu0
        %v452 = vadd.f32 0.0, %v451
        %v453 = vpop.f32.mrf.mxu0
        %v454 = vpop.f32.mrf.mxu0
        %v455 = vadd.f32 0.0, %v454
        %v456 = vpop.f32.mrf.mxu0
        %457 = vmatprep.mubr.bf16.mxu0 0
        %458 = vmatmul.mubr.bf16.gmra.mxu0 %v317
        %v459 = vpop.f32.mrf.mxu0
        %v460 = vadd.f32 0.0, %v459
        %v461 = vpop.f32.mrf.mxu0
        %v462 = vpop.f32.mrf.mxu0
        %v463 = vadd.f32 0.0, %v462
        %v464 = vpop.f32.mrf.mxu0
        %465 = vmatprep.mubr.bf16.mxu0 0
        %466 = vmatmul.mubr.bf16.gmra.mxu0 %v318
        %v467 = vpop.f32.mrf.mxu0
        %v468 = vadd.f32 0.0, %v467
        %v469 = vpop.f32.mrf.mxu0
        %v470 = vpop.f32.mrf.mxu0
        %v471 = vadd.f32 0.0, %v470
        %v472 = vpop.f32.mrf.mxu0
        %473 = vmatprep.mubr.bf16.mxu0 0
        %474 = vmatmul.mubr.bf16.gmra.mxu0 %v319
        %v475 = vpop.f32.mrf.mxu0
        %v476 = vadd.f32 0.0, %v475
        %v477 = vpop.f32.mrf.mxu0
        %v478 = vpop.f32.mrf.mxu0
        %v479 = vadd.f32 0.0, %v478
        %v480 = vpop.f32.mrf.mxu0
        %481 = vmatprep.mubr.bf16.mxu0 0
        %482 = vmatmul.mubr.bf16.gmra.mxu0 %v320
        %v483 = vpop.f32.mrf.mxu0
        %v484 = vadd.f32 0.0, %v483
        %v485 = vpop.f32.mrf.mxu0
        %v486 = vpop.f32.mrf.mxu0
        %v487 = vadd.f32 0.0, %v486
        %v488 = vpop.f32.mrf.mxu0
        %489 = vmatprep.mubr.bf16.mxu0 0
        %490 = vmatmul.mubr.bf16.gmra.mxu0 %v321
        %v491 = vpop.f32.mrf.mxu0
        %v492 = vadd.f32 0.0, %v491
        %v493 = vpop.f32.mrf.mxu0
        %v494 = vpop.f32.mrf.mxu0
        %v495 = vadd.f32 0.0, %v494
        %v496 = vpop.f32.mrf.mxu0
        %497 = vmatprep.mubr.bf16.mxu0 0
        %498 = vmatmul.mubr.bf16.gmra.mxu0 %v322
        %v499 = vpop.f32.mrf.mxu0
        %v500 = vadd.f32 0.0, %v499
        %v501 = vpop.f32.mrf.mxu0
        %v502 = vpop.f32.mrf.mxu0
        %v503 = vadd.f32 0.0, %v502
        %v504 = vpop.f32.mrf.mxu0
        %505 = vmatprep.mubr.bf16.mxu0 0
        %506 = vmatmul.mubr.bf16.gmra.mxu0 %v323
        %v507 = vpop.f32.mrf.mxu0
        %v508 = vadd.f32 0.0, %v507
        %v509 = vpop.f32.mrf.mxu0
        %v510 = vpop.f32.mrf.mxu0
        %v511 = vadd.f32 0.0, %v510
        %v512 = vpop.f32.mrf.mxu0
        %513 = vmatprep.mubr.bf16.mxu0 0
        %514 = vmatmul.mubr.bf16.gmra.mxu0 %v324
        %v515 = vpop.f32.mrf.mxu0
        %v516 = vadd.f32 0.0, %v515
        %v517 = vpop.f32.mrf.mxu0
        %v518 = vpop.f32.mrf.mxu0
        %v519 = vadd.f32 0.0, %v518
        %v520 = vpop.f32.mrf.mxu0
        %521 = vmatprep.mubr.bf16.mxu0 0
        %522 = vmatmul.mubr.bf16.gmra.mxu0 %v325
        %v523 = vpop.f32.mrf.mxu0
        %v524 = vadd.f32 0.0, %v523
        %v525 = vpop.f32.mrf.mxu0
        %v526 = vpop.f32.mrf.mxu0
        %v527 = vadd.f32 0.0, %v526
        %v528 = vpop.f32.mrf.mxu0
        %529 = vmatprep.mubr.bf16.mxu0 0
        %530 = vmatmul.mubr.bf16.gmra.mxu0 %v326
        %v531 = vpop.f32.mrf.mxu0
        %v532 = vadd.f32 0.0, %v531
        %v533 = vpop.f32.mrf.mxu0
        %v534 = vpop.f32.mrf.mxu0
        %v535 = vadd.f32 0.0, %v534
        %v536 = vpop.f32.mrf.mxu0
        %537 = vmatprep.mubr.bf16.mxu0 0
        %538 = vmatmul.mubr.bf16.gmra.mxu0 %v327
        %v539 = vpop.f32.mrf.mxu0
        %v540 = vadd.f32 0.0, %v539
        %v541 = vpop.f32.mrf.mxu0
        %v542 = vpop.f32.mrf.mxu0
        %v543 = vadd.f32 0.0, %v542
        %v544 = vpop.f32.mrf.mxu0
        %545 = vmatprep.mubr.bf16.mxu0 0
        %546 = vmatmul.mubr.bf16.gmra.mxu0 %v328
        %v547 = vpop.f32.mrf.mxu0
        %v548 = vadd.f32 0.0, %v547
        %v549 = vpop.f32.mrf.mxu0
        %v550 = vpop.f32.mrf.mxu0
        %v551 = vadd.f32 0.0, %v550
        %v552 = vpop.f32.mrf.mxu0
        %553 = vdwg.mxu0
        %554 = vst [vmem:[%s197] sm:$0xff] %v428
        %555 = vst [vmem:[%s197 + $0x8] sm:$0xff] %v431
        %556 = vst [vmem:[%s197 + $0x10] sm:$0xff] %v436
        %557 = vst [vmem:[%s197 + $0x18] sm:$0xff] %v439
        %558 = vst [vmem:[%s197 + $0x20] sm:$0xff] %v444
        %559 = vst [vmem:[%s197 + $0x28] sm:$0xff] %v447
        %560 = vst [vmem:[%s197 + $0x30] sm:$0xff] %v452
        %561 = vst [vmem:[%s197 + $0x38] sm:$0xff] %v455
        %562 = vst [vmem:[%s197 + $0x40] sm:$0xff] %v460
        %563 = vst [vmem:[%s197 + $0x48] sm:$0xff] %v463
        %564 = vst [vmem:[%s197 + $0x50] sm:$0xff] %v468
        %565 = vst [vmem:[%s197 + $0x58] sm:$0xff] %v471
        %566 = vst [vmem:[%s197 + $0x60] sm:$0xff] %v476
        %567 = vst [vmem:[%s197 + $0x68] sm:$0xff] %v479
        %568 = vst [vmem:[%s197 + $0x70] sm:$0xff] %v484
        %569 = vst [vmem:[%s197 + $0x78] sm:$0xff] %v487
        %570 = vst [vmem:[%s197 + $0x80] sm:$0xff] %v492
        %571 = vst [vmem:[%s197 + $0x88] sm:$0xff] %v495
        %572 = vst [vmem:[%s197 + $0x90] sm:$0xff] %v500
        %573 = vst [vmem:[%s197 + $0x98] sm:$0xff] %v503
        %574 = vst [vmem:[%s197 + $0xa0] sm:$0xff] %v508
        %575 = vst [vmem:[%s197 + $0xa8] sm:$0xff] %v511
        %576 = vst [vmem:[%s197 + $0xb0] sm:$0xff] %v516
        %577 = vst [vmem:[%s197 + $0xb8] sm:$0xff] %v519
        %578 = vst [vmem:[%s197 + $0xc0] sm:$0xff] %v524
        %579 = vst [vmem:[%s197 + $0xc8] sm:$0xff] %v527
        %580 = vst [vmem:[%s197 + $0xd0] sm:$0xff] %v532
        %581 = vst [vmem:[%s197 + $0xd8] sm:$0xff] %v535
        %582 = vst [vmem:[%s197 + $0xe0] sm:$0xff] %v540
        %583 = vst [vmem:[%s197 + $0xe8] sm:$0xff] %v543
        %584 = vst [vmem:[%s197 + $0xf0] sm:$0xff] %v548
        %585 = vst [vmem:[%s197 + $0xf8] sm:$0xff] %v551
        %s586 = sand.u32 %s94, 1
        %s587 = scalar_lea.sflag [#allocation4], %s586
        %s588 = sand.u32 %s94, 1
        %s589 = smul.addr %s588, 256
        %s590 = scalar_lea.vmem [#allocation7], %s589
        // Predicated region
        $region37: #{tpu_custom_call.1} parent=27 // pred_check
          %p591 = pneg %p104
        $region38: #{tpu_custom_call.1} parent=27 // pred_check_branch
          %593 = sbr.rel (%p591) target = $region40
        $region39: #{tpu_custom_call.1} parent=27 // pred_region
          %s594 = smul.u32 32, %s24
          %s596 = ssub.s32 4096, 4096
          %597 = vsyncadd %s587, %s596
          %s598 = sadd.s32 %s25, %s594
          %s599 = smul.addr %s598, 128
          %s600 = scalar_lea.hbm %s2, %s599
          %s601 = sshll.u32 %s590, 4
          %s602 = int_to_ptr.vmem [resolvable:$true] %s601
          %607 = dma.vmem_to_hbm [thread:$0]  %s602, 4096, %s600, %s587, 128, 128, 8
        $region40: #{tpu_custom_call.1} parent=27 // pred_fallthru
          _
      $region28: #{tpu_custom_call.1} parent=5 // pred_fallthru
        _
      %p608 = scmp.le.s32.totalorder 2, %s15
      // Predicated region
      $region41: #{tpu_custom_call.1} parent=5 // pred_check
        %p609 = pneg %p608
      $region42: #{tpu_custom_call.1} parent=5 // pred_check_branch
        %611 = sbr.rel (%p609) target = $region44
      $region43: #{tpu_custom_call.1} parent=5 // pred_region
        %s612 = ssub.s32 %s15, 2
        // Predicated region
        $region45: #{tpu_custom_call.1} parent=43 // pred_check
          %p613 = pneg %p110
        $region46: #{tpu_custom_call.1} parent=43 // pred_check_branch
          %615 = sbr.rel (%p613) target = $region48
        $region47: #{tpu_custom_call.1} parent=43 // pred_region
          %s616 = sand.u32 %s95, 1
          %s617 = scalar_lea.sflag [#allocation4], %s616
          %s618 = sand.u32 %s95, 1
          %s619 = smul.addr %s618, 256
          %s620 = scalar_lea.vmem [#allocation7], %s619
          %621 = dma.done %s617, 4096
        $region48: #{tpu_custom_call.1} parent=43 // pred_fallthru
          _
      $region44: #{tpu_custom_call.1} parent=5 // pred_fallthru
        _
    $region6: #{tpu_custom_call.1} parent=1 // loop_footer
      %s19 = sadd.s32 1, %s15
    $region7: #{tpu_custom_call.1} parent=1 // loop_footer_branch
      %14 = sbr.rel target = $region3
    $region8: #{tpu_custom_call.1} parent=1 // loop_exit
      _
    %622 = vsyncpa [#allocation3], 1
    %s623 = scalar_lea.sflag [#allocation3], 1
    %624 = vsyncpa %s623, 1
    %625 = vsyncpa [#allocation6], 1
    %626 = vsyncpa [#allocation4], 1
    %s627 = scalar_lea.sflag [#allocation4], 1
    %628 = vsyncpa %s627, 1

// kernel: tpu_custom_call.1
$region0: #{tpu_custom_call.1}
  #allocation0 [shape = 'u32[]', space=smem, size = 0x4, offset = 0x4, fixed_abs, tag = 'smem constant byte address 0x4 - core index']
  #allocation1 [shape = 'u32[144,128]{1,0:T(1,128)}', space=vmem, size = 0x12000, scoped, tag = 'internal scratch']
  %s0 = inlined_call_operand.hbm [shape: bf16[512,128], index: 0, kind: input, shape index: {}]
  %s1 = inlined_call_operand.hbm [shape: bf16[128,128], index: 1, kind: input, shape index: {}]
  %s2 = inlined_call_operand.hbm [shape: f32[512,128], index: 2, kind: output, shape index: {}]
  %s3 = sld [smem:[#allocation0]]
  $region49: #{tpu_custom_call.1} parent=0
    _
  %s5 = ssub.s32 1, %s3
  %s6 = scalar_select 0, %s5, %s3
  $region1: #{tpu_custom_call.1} parent=0
    #allocation2 [shape = 'u8[131072]{0}', space=vmem, size = 0x20000, scoped, tag = 'input window, operand 0']
    #allocation3 [shape = 's32[2]{0}', space=sflag, size = 0x8, scoped, tag = 'scoped memory for tpu_custom_call.1']
    #allocation4 [shape = 's32[2]{0}', space=sflag, size = 0x8, scoped, tag = 'scoped memory for tpu_custom_call.1']
    #allocation5 [shape = 'u8[32768]{0}', space=vmem, size = 0x8000, scoped, tag = 'input window, operand 1, single buffered']
    #allocation6 [shape = 's32[1]{0}', space=sflag, size = 0x4, scoped, tag = 'scoped memory for tpu_custom_call.1']
    #allocation7 [shape = 'u8[262144]{0}', space=vmem, size = 0x40000, scoped, tag = 'output window, operand 0']
    %7 = vsyncpa [#allocation3], 0
    %s8 = scalar_lea.sflag [#allocation3], 1
    %9 = vsyncpa %s8, 0
    %10 = vsyncpa [#allocation6], 0
    %11 = vsyncpa [#allocation4], 0
    %s12 = scalar_lea.sflag [#allocation4], 1
    %13 = vsyncpa %s12, 0
    loop: start=0, step=1, limit=4
    $region2: #{tpu_custom_call.1} parent=1 // loop_pre_header
      _
    $region3: #{tpu_custom_call.1} parent=1 // loop_header
      %s15 = sphi 0, %s19
      %p16 = scmp.ge.s32.totalorder %s15, 4
      %s22 = sphi 0, %s34
      %s23 = sphi 0, %s30
      %s24 = sphi 0, %s22
      %s25 = sphi 0, %s23
      %s26 = sphi 0, %s24
      %s27 = sphi 0, %s25
      %s37 = sphi 0, %s39
      %s40 = sphi 0, %s37
      %s41 = sphi 0, %s40
      %s57 = sphi 0, %s41
      %s63 = sphi 0, %s65
      %s66 = sphi 0, %s63
      %s67 = sphi 0, %s66
      %s83 = sphi 0, %s67
      %s91 = sphi 0, %s93
      %s94 = sphi 0, %s91
      %s95 = sphi 0, %s94
      %s111 = sphi 0, %s95
    $region4: #{tpu_custom_call.1} parent=1 // loop_header_branch
      %18 = sbr.rel (%p16) target = $region8
    $region5: #{tpu_custom_call.1} parent=1 // loop_body
      %s20 = ssub.s32 %s15, 1
      %s21 = ssub.s32 %s15, 2
      %s28 = sadd.s32 1, %s23
      %p29 = scmp.ge.s32.totalorder %s28, 1
      %s30 = scalar_select %p29, 0, %s28
      %s31 = sadd.s32 1, %s22
      %s32 = scalar_select %p29, %s31, %s22
      %p33 = scmp.ge.s32.totalorder %s32, 2
      %s34 = scalar_select %p33, 0, %s32
      %s35 = ssub.s32 %s22, %s34
      %p36 = scmp.eq.s32.totalorder %s35, 0
      %s38 = sadd.s32 %s37, 1
      %s39 = scalar_select %p36, %s37, %s38
      %p42 = pneg %p36
      %p43 = scmp.eq.s32.totalorder %s15, 1
      %p44 = por %p42, %p43
      %p45 = scmp.ne.s32.totalorder %s37, %s40
      %p46 = scmp.eq.s32.totalorder %s15, 0
      %p47 = por %p45, %p46
      %p48 = scmp.ne.s32.totalorder %s37, %s40
      %p49 = scmp.eq.s32.totalorder %s20, 1
      %p50 = por %p48, %p49
      %p51 = scmp.ne.s32.totalorder %s40, %s41
      %p52 = scmp.eq.s32.totalorder %s20, 0
      %p53 = por %p51, %p52
      %p54 = scmp.ne.s32.totalorder %s40, %s41
      %p55 = scmp.eq.s32.totalorder %s21, 1
      %p56 = por %p54, %p55
      %p58 = scmp.ne.s32.totalorder %s41, %s57
      %p59 = scmp.eq.s32.totalorder %s21, 0
      %p60 = por %p58, %p59
      %s61 = ssub.s32 %s23, %s30
      %p62 = scmp.eq.s32.totalorder %s61, 0
      %s64 = sadd.s32 %s63, 1
      %s65 = scalar_select %p62, %s63, %s64
      %p68 = pneg %p62
      %p69 = scmp.eq.s32.totalorder %s15, 1
      %p70 = por %p68, %p69
      %p71 = scmp.ne.s32.totalorder %s63, %s66
      %p72 = scmp.eq.s32.totalorder %s15, 0
      %p73 = por %p71, %p72
      %p74 = scmp.ne.s32.totalorder %s63, %s66
      %p75 = scmp.eq.s32.totalorder %s20, 1
      %p76 = por %p74, %p75
      %p77 = scmp.ne.s32.totalorder %s66, %s67
      %p78 = scmp.eq.s32.totalorder %s20, 0
      %p79 = por %p77, %p78
      %p80 = scmp.ne.s32.totalorder %s66, %s67
      %p81 = scmp.eq.s32.totalorder %s21, 1
      %p82 = por %p80, %p81
      %p84 = scmp.ne.s32.totalorder %s67, %s83
      %p85 = scmp.eq.s32.totalorder %s21, 0
      %p86 = por %p84, %p85
      %s87 = ssub.s32 %s22, %s34
      %s88 = ssub.s32 %s23, %s30
      %s89 = sor.u32 %s87, %s88
      %p90 = scmp.eq.s32.totalorder %s89, 0
      %s92 = sadd.s32 %s91, 1
      %s93 = scalar_select %p90, %s91, %s92
      %p96 = pneg %p90
      %p97 = scmp.eq.s32.totalorder %s15, 1
      %p98 = por %p96, %p97
      %p99 = scmp.ne.s32.totalorder %s91, %s94
      %p100 = scmp.eq.s32.totalorder %s15, 0
      %p101 = por %p99, %p100
      %p102 = scmp.ne.s32.totalorder %s91, %s94
      %p103 = scmp.eq.s32.totalorder %s20, 1
      %p104 = por %p102, %p103
      %p105 = scmp.ne.s32.totalorder %s94, %s95
      %p106 = scmp.eq.s32.totalorder %s20, 0
      %p107 = por %p105, %p106
      %p108 = scmp.ne.s32.totalorder %s94, %s95
      %p109 = scmp.eq.s32.totalorder %s21, 1
      %p110 = por %p108, %p109
      %p112 = scmp.ne.s32.totalorder %s95, %s111
      %p113 = scmp.eq.s32.totalorder %s21, 0
      %p114 = por %p112, %p113
      %p115 = scmp.le.s32.totalorder 1, %s15
      %p116 = scmp.lt.s32.totalorder %s15, 3
      %p117 = pnand %p115, %p116
      %p118 = pneg %p117
      // Predicated region
      $region9: #{tpu_custom_call.1} parent=5 // pred_check
        _
      $region10: #{tpu_custom_call.1} parent=5 // pred_check_branch
        %120 = sbr.rel (%p117) target = $region12
      $region11: #{tpu_custom_call.1} parent=5 // pred_region
        %s121 = ssub.s32 %s15, 1
        // Predicated region
        $region13: #{tpu_custom_call.1} parent=11 // pred_check
          %p122 = pneg %p79
        $region14: #{tpu_custom_call.1} parent=11 // pred_check_branch
          %124 = sbr.rel (%p122) target = $region16
        $region15: #{tpu_custom_call.1} parent=11 // pred_region
          %s126 = ssub.s32 1024, 1024
          %127 = vsyncadd [#allocation6], %s126
          %s128 = smul.addr %s25, 64
          %s129 = scalar_lea.hbm %s1, %s128
          %s130 = sshll.u32 [#allocation5], 4
          %s131 = int_to_ptr.vmem [resolvable:$true] %s130
          %136 = dma.hbm_to_vmem [thread:$0]  %s129, 1024, %s131, [#allocation6], 64, 64, 4
        $region16: #{tpu_custom_call.1} parent=11 // pred_fallthru
          _
      $region12: #{tpu_custom_call.1} parent=5 // pred_fallthru
        _
      %p137 = scmp.lt.s32.totalorder %s15, 2
      // Predicated region
      $region17: #{tpu_custom_call.1} parent=5 // pred_check
        %p138 = pneg %p137
      $region18: #{tpu_custom_call.1} parent=5 // pred_check_branch
        %140 = sbr.rel (%p138) target = $region20
      $region19: #{tpu_custom_call.1} parent=5 // pred_region
        // Predicated region
        $region21: #{tpu_custom_call.1} parent=19 // pred_check
          %p141 = pneg %p47
        $region22: #{tpu_custom_call.1} parent=19 // pred_check_branch
          %143 = sbr.rel (%p141) target = $region24
        $region23: #{tpu_custom_call.1} parent=19 // pred_region
          %s144 = sand.u32 %s37, 1
          %s145 = scalar_lea.sflag [#allocation3], %s144
          %s146 = sand.u32 %s37, 1
          %s147 = smul.addr %s146, 128
          %s148 = scalar_lea.vmem [#allocation2], %s147
          %s149 = smul.u32 32, %s22
          %s151 = ssub.s32 2048, 2048
          %152 = vsyncadd %s145, %s151
          %s153 = smul.addr %s149, 64
          %s154 = scalar_lea.hbm %s0, %s153
          %s155 = sshll.u32 %s148, 4
          %s156 = int_to_ptr.vmem [resolvable:$true] %s155
          %161 = dma.hbm_to_vmem [thread:$0]  %s154, 2048, %s156, %s145, 64, 64, 4
        $region24: #{tpu_custom_call.1} parent=19 // pred_fallthru
          _
      $region20: #{tpu_custom_call.1} parent=5 // pred_fallthru
        _
      %p162 = scmp.le.s32.totalorder 1, %s15
      %p163 = scmp.lt.s32.totalorder %s15, 3
      %p164 = pnand %p162, %p163
      %p165 = pneg %p164
      // Predicated region
      $region25: #{tpu_custom_call.1} parent=5 // pred_check
        _
      $region26: #{tpu_custom_call.1} parent=5 // pred_check_branch
        %167 = sbr.rel (%p164) target = $region28
      $region27: #{tpu_custom_call.1} parent=5 // pred_region
        %s168 = ssub.s32 %s15, 1
        %s169 = sand.u32 %s40, 1
        %s170 = scalar_lea.sflag [#allocation3], %s169
        %s171 = sand.u32 %s40, 1
        %s172 = smul.addr %s171, 128
        %s173 = scalar_lea.vmem [#allocation2], %s172
        // Predicated region
        $region29: #{tpu_custom_call.1} parent=27 // pred_check
          %p174 = pneg %p53
        $region30: #{tpu_custom_call.1} parent=27 // pred_check_branch
          %176 = sbr.rel (%p174) target = $region32
        $region31: #{tpu_custom_call.1} parent=27 // pred_region
          %177 = dma.done %s170, 2048
        $region32: #{tpu_custom_call.1} parent=27 // pred_fallthru
          _
        // Predicated region
        $region33: #{tpu_custom_call.1} parent=27 // pred_check
          %p178 = pneg %p79
        $region34: #{tpu_custom_call.1} parent=27 // pred_check_branch
          %180 = sbr.rel (%p178) target = $region36
        $region35: #{tpu_custom_call.1} parent=27 // pred_region
          %181 = dma.done [#allocation6], 1024
        $region36: #{tpu_custom_call.1} parent=27 // pred_fallthru
          _
        %s182 = sand.u32 %s40, 1
        %s183 = scalar_lea.sflag [#allocation3], %s182
        %s184 = sand.u32 %s40, 1
        %s185 = smul.addr %s184, 128
        %s186 = scalar_lea.vmem [#allocation2], %s185
        %p187 = pneg %p53
        %p188 = pneg %p50
        %p189 = pneg %p79
        %p190 = pneg %p76
        %p191 = pneg %p107
        %p192 = pneg %p104
        %s193 = sand.u32 %s94, 1
        %s194 = scalar_lea.sflag [#allocation4], %s193
        %s195 = sand.u32 %s94, 1
        %s196 = smul.addr %s195, 256
        %s197 = scalar_lea.vmem [#allocation7], %s196
        %s198 = smul.u32 32, %s24
        %s199 = smul.u32 32, %s24
        %v201 = vld [vmem:[%s173] sm:$0xf]
        %v202 = vld [vmem:[%s173 + $0x4] sm:$0xf]
        %v203 = vld [vmem:[%s173 + $0x8] sm:$0xf]
        %v204 = vld [vmem:[%s173 + $0xc] sm:$0xf]
        %v205 = vld [vmem:[%s173 + $0x10] sm:$0xf]
        %v206 = vld [vmem:[%s173 + $0x14] sm:$0xf]
        %v207 = vld [vmem:[%s173 + $0x18] sm:$0xf]
        %v208 = vld [vmem:[%s173 + $0x1c] sm:$0xf]
        %v209 = vld [vmem:[%s173 + $0x20] sm:$0xf]
        %v210 = vld [vmem:[%s173 + $0x24] sm:$0xf]
        %v211 = vld [vmem:[%s173 + $0x28] sm:$0xf]
        %v212 = vld [vmem:[%s173 + $0x2c] sm:$0xf]
        %v213 = vld [vmem:[%s173 + $0x30] sm:$0xf]
        %v214 = vld [vmem:[%s173 + $0x34] sm:$0xf]
        %v215 = vld [vmem:[%s173 + $0x38] sm:$0xf]
        %v216 = vld [vmem:[%s173 + $0x3c] sm:$0xf]
        %v217 = vld [vmem:[%s173 + $0x40] sm:$0xf]
        %v218 = vld [vmem:[%s173 + $0x44] sm:$0xf]
        %v219 = vld [vmem:[%s173 + $0x48] sm:$0xf]
        %v220 = vld [vmem:[%s173 + $0x4c] sm:$0xf]
        %v221 = vld [vmem:[%s173 + $0x50] sm:$0xf]
        %v222 = vld [vmem:[%s173 + $0x54] sm:$0xf]
        %v223 = vld [vmem:[%s173 + $0x58] sm:$0xf]
        %v224 = vld [vmem:[%s173 + $0x5c] sm:$0xf]
        %v225 = vld [vmem:[%s173 + $0x60] sm:$0xf]
        %v226 = vld [vmem:[%s173 + $0x64] sm:$0xf]
        %v227 = vld [vmem:[%s173 + $0x68] sm:$0xf]
        %v228 = vld [vmem:[%s173 + $0x6c] sm:$0xf]
        %v229 = vld [vmem:[%s173 + $0x70] sm:$0xf]
        %v230 = vld [vmem:[%s173 + $0x74] sm:$0xf]
        %v231 = vld [vmem:[%s173 + $0x78] sm:$0xf]
        %v232 = vld [vmem:[%s173 + $0x7c] sm:$0xf]
        %v233 = vld [vmem:[#allocation5] sm:$0xf]
        %v234 = vld [vmem:[#allocation5 + $0x4] sm:$0xf]
        %v235 = vld [vmem:[#allocation5 + $0x8] sm:$0xf]
        %v236 = vld [vmem:[#allocation5 + $0xc] sm:$0xf]
        %v237 = vld [vmem:[#allocation5 + $0x10] sm:$0xf]
        %v238 = vld [vmem:[#allocation5 + $0x14] sm:$0xf]
        %v239 = vld [vmem:[#allocation5 + $0x18] sm:$0xf]
        %v240 = vld [vmem:[#allocation5 + $0x1c] sm:$0xf]
        %v241 = vld [vmem:[#allocation5 + $0x20] sm:$0xf]
        %v242 = vld [vmem:[#allocation5 + $0x24] sm:$0xf]
        %v243 = vld [vmem:[#allocation5 + $0x28] sm:$0xf]
        %v244 = vld [vmem:[#allocation5 + $0x2c] sm:$0xf]
        %v245 = vld [vmem:[#allocation5 + $0x30] sm:$0xf]
        %v246 = vld [vmem:[#allocation5 + $0x34] sm:$0xf]
        %v247 = vld [vmem:[#allocation5 + $0x38] sm:$0xf]
        %v248 = vld [vmem:[#allocation5 + $0x3c] sm:$0xf]
        %v281 = vunpack.c.l.b16 %v201
        %v282 = vunpack.c.l.b16 %v202
        %v283 = vunpack.c.l.b16 %v203
        %v284 = vunpack.c.l.b16 %v204
        %v285 = vunpack.c.l.b16 %v205
        %v286 = vunpack.c.l.b16 %v206
        %v287 = vunpack.c.l.b16 %v207
        %v288 = vunpack.c.l.b16 %v208
        %v289 = vunpack.c.l.b16 %v209
        %v290 = vunpack.c.l.b16 %v210
        %v291 = vunpack.c.l.b16 %v211
        %v292 = vunpack.c.l.b16 %v212
        %v293 = vunpack.c.l.b16 %v213
        %v294 = vunpack.c.l.b16 %v214
        %v295 = vunpack.c.l.b16 %v215
        %v296 = vunpack.c.l.b16 %v216
        %v297 = vunpack.c.l.b16 %v217
        %v298 = vunpack.c.l.b16 %v218
        %v299 = vunpack.c.l.b16 %v219
        %v300 = vunpack.c.l.b16 %v220
        %v301 = vunpack.c.l.b16 %v221
        %v302 = vunpack.c.l.b16 %v222
        %v303 = vunpack.c.l.b16 %v223
        %v304 = vunpack.c.l.b16 %v224
        %v305 = vunpack.c.l.b16 %v225
        %v306 = vunpack.c.l.b16 %v226
        %v307 = vunpack.c.l.b16 %v227
        %v308 = vunpack.c.l.b16 %v228
        %v309 = vunpack.c.l.b16 %v229
        %v310 = vunpack.c.l.b16 %v230
        %v311 = vunpack.c.l.b16 %v231
        %v312 = vunpack.c.l.b16 %v232
        %v313 = vpack.c.b16 %v282, %v281
        %v314 = vpack.c.b16 %v284, %v283
        %v315 = vpack.c.b16 %v286, %v285
        %v316 = vpack.c.b16 %v288, %v287
        %v317 = vpack.c.b16 %v290, %v289
        %v318 = vpack.c.b16 %v292, %v291
        %v319 = vpack.c.b16 %v294, %v293
        %v320 = vpack.c.b16 %v296, %v295
        %v321 = vpack.c.b16 %v298, %v297
        %v322 = vpack.c.b16 %v300, %v299
        %v323 = vpack.c.b16 %v302, %v301
        %v324 = vpack.c.b16 %v304, %v303
        %v325 = vpack.c.b16 %v306, %v305
        %v326 = vpack.c.b16 %v308, %v307
        %v327 = vpack.c.b16 %v310, %v309
        %v328 = vpack.c.b16 %v312, %v311
        %v361 = vunpack.c.l.b16 %v233
        %v362 = vunpack.c.l.b16 %v234
        %v363 = vunpack.c.l.b16 %v235
        %v364 = vunpack.c.l.b16 %v236
        %v365 = vunpack.c.l.b16 %v237
        %v366 = vunpack.c.l.b16 %v238
        %v367 = vunpack.c.l.b16 %v239
        %v368 = vunpack.c.l.b16 %v240
        %v369 = vunpack.c.l.b16 %v241
        %v370 = vunpack.c.l.b16 %v242
        %v371 = vunpack.c.l.b16 %v243
        %v372 = vunpack.c.l.b16 %v244
        %v373 = vunpack.c.l.b16 %v245
        %v374 = vunpack.c.l.b16 %v246
        %v375 = vunpack.c.l.b16 %v247
        %v376 = vunpack.c.l.b16 %v248
        %v377 = vpack.c.b16 %v362, %v361
        %v378 = vpack.c.b16 %v364, %v363
        %v379 = vpack.c.b16 %v366, %v365
        %v380 = vpack.c.b16 %v368, %v367
        %v381 = vpack.c.b16 %v370, %v369
        %v382 = vpack.c.b16 %v372, %v371
        %v383 = vpack.c.b16 %v374, %v373
        %v384 = vpack.c.b16 %v376, %v375
        %393 = vmatprep.subr.bf16.mxu0 0
        %394 = vmatpush1.bf16.msra.mxu0 %v384
        %395 = vmatprep.subr.bf16.mxu0 0
        %396 = vmatpush1.bf16.msra.mxu0 %v383
        %397 = vmatprep.subr.bf16.mxu0 0
        %398 = vmatpush1.bf16.msra.mxu0 %v382
        %399 = vmatprep.subr.bf16.mxu0 0
        %400 = vmatpush1.bf16.msra.mxu0 %v381
        %401 = vmatprep.subr.bf16.mxu0 0
        %402 = vmatpush1.bf16.msra.mxu0 %v380
        %403 = vmatprep.subr.bf16.mxu0 0
        %404 = vmatpush1.bf16.msra.mxu0 %v379
        %405 = vmatprep.subr.bf16.mxu0 0
        %406 = vmatpush1.bf16.msra.mxu0 %v378
        %407 = vmatprep.subr.bf16.mxu0 0
        %408 = vmatpush1.bf16.msra.mxu0 %v377
        %409 = vmatprep.subr.bf16.mxu0 0
        %410 = vmatpush2.bf16.msra.mxu0 0
        %411 = vmatprep.subr.bf16.mxu0 0
        %412 = vmatpush2.bf16.msra.mxu0 0
        %413 = vmatprep.subr.bf16.mxu0 0
        %414 = vmatpush2.bf16.msra.mxu0 0
        %415 = vmatprep.subr.bf16.mxu0 0
        %416 = vmatpush2.bf16.msra.mxu0 0
        %417 = vmatprep.subr.bf16.mxu0 0
        %418 = vmatpush2.bf16.msra.mxu0 0
        %419 = vmatprep.subr.bf16.mxu0 0
        %420 = vmatpush2.bf16.msra.mxu0 0
        %421 = vmatprep.subr.bf16.mxu0 0
        %422 = vmatpush2.bf16.msra.mxu0 0
        %423 = vmatprep.subr.bf16.mxu0 0
        %424 = vmatpush2.bf16.msra.mxu0 0
        %425 = vmatprep.mubr.bf16.mxu0 0
        %426 = vmatmul.mubr.bf16.gmra.mxu0 %v313
        %v427 = vpop.f32.mrf.mxu0
        %v428 = vadd.f32 0.0, %v427
        %v429 = vpop.f32.mrf.mxu0
        %v430 = vpop.f32.mrf.mxu0
        %v431 = vadd.f32 0.0, %v430
        %v432 = vpop.f32.mrf.mxu0
        %433 = vmatprep.mubr.bf16.mxu0 0
        %434 = vmatmul.mubr.bf16.gmra.mxu0 %v314
        %v435 = vpop.f32.mrf.mxu0
        %v436 = vadd.f32 0.0, %v435
        %v437 = vpop.f32.mrf.mxu0
        %v438 = vpop.f32.mrf.mxu0
        %v439 = vadd.f32 0.0, %v438
        %v440 = vpop.f32.mrf.mxu0
        %441 = vmatprep.mubr.bf16.mxu0 0
        %442 = vmatmul.mubr.bf16.gmra.mxu0 %v315
        %v443 = vpop.f32.mrf.mxu0
        %v444 = vadd.f32 0.0, %v443
        %v445 = vpop.f32.mrf.mxu0
        %v446 = vpop.f32.mrf.mxu0
        %v447 = vadd.f32 0.0, %v446
        %v448 = vpop.f32.mrf.mxu0
        %449 = vmatprep.mubr.bf16.mxu0 0
        %450 = vmatmul.mubr.bf16.gmra.mxu0 %v316
        %v451 = vpop.f32.mrf.mxu0
        %v452 = vadd.f32 0.0, %v451
        %v453 = vpop.f32.mrf.mxu0
        %v454 = vpop.f32.mrf.mxu0
        %v455 = vadd.f32 0.0, %v454
        %v456 = vpop.f32.mrf.mxu0
        %457 = vmatprep.mubr.bf16.mxu0 0
        %458 = vmatmul.mubr.bf16.gmra.mxu0 %v317
        %v459 = vpop.f32.mrf.mxu0
        %v460 = vadd.f32 0.0, %v459
        %v461 = vpop.f32.mrf.mxu0
        %v462 = vpop.f32.mrf.mxu0
        %v463 = vadd.f32 0.0, %v462
        %v464 = vpop.f32.mrf.mxu0
        %465 = vmatprep.mubr.bf16.mxu0 0
        %466 = vmatmul.mubr.bf16.gmra.mxu0 %v318
        %v467 = vpop.f32.mrf.mxu0
        %v468 = vadd.f32 0.0, %v467
        %v469 = vpop.f32.mrf.mxu0
        %v470 = vpop.f32.mrf.mxu0
        %v471 = vadd.f32 0.0, %v470
        %v472 = vpop.f32.mrf.mxu0
        %473 = vmatprep.mubr.bf16.mxu0 0
        %474 = vmatmul.mubr.bf16.gmra.mxu0 %v319
        %v475 = vpop.f32.mrf.mxu0
        %v476 = vadd.f32 0.0, %v475
        %v477 = vpop.f32.mrf.mxu0
        %v478 = vpop.f32.mrf.mxu0
        %v479 = vadd.f32 0.0, %v478
        %v480 = vpop.f32.mrf.mxu0
        %481 = vmatprep.mubr.bf16.mxu0 0
        %482 = vmatmul.mubr.bf16.gmra.mxu0 %v320
        %v483 = vpop.f32.mrf.mxu0
        %v484 = vadd.f32 0.0, %v483
        %v485 = vpop.f32.mrf.mxu0
        %v486 = vpop.f32.mrf.mxu0
        %v487 = vadd.f32 0.0, %v486
        %v488 = vpop.f32.mrf.mxu0
        %489 = vmatprep.mubr.bf16.mxu0 0
        %490 = vmatmul.mubr.bf16.gmra.mxu0 %v321
        %v491 = vpop.f32.mrf.mxu0
        %v492 = vadd.f32 0.0, %v491
        %v493 = vpop.f32.mrf.mxu0
        %v494 = vpop.f32.mrf.mxu0
        %v495 = vadd.f32 0.0, %v494
        %v496 = vpop.f32.mrf.mxu0
        %497 = vmatprep.mubr.bf16.mxu0 0
        %498 = vmatmul.mubr.bf16.gmra.mxu0 %v322
        %v499 = vpop.f32.mrf.mxu0
        %v500 = vadd.f32 0.0, %v499
        %v501 = vpop.f32.mrf.mxu0
        %v502 = vpop.f32.mrf.mxu0
        %v503 = vadd.f32 0.0, %v502
        %v504 = vpop.f32.mrf.mxu0
        %505 = vmatprep.mubr.bf16.mxu0 0
        %506 = vmatmul.mubr.bf16.gmra.mxu0 %v323
        %v507 = vpop.f32.mrf.mxu0
        %v508 = vadd.f32 0.0, %v507
        %v509 = vpop.f32.mrf.mxu0
        %v510 = vpop.f32.mrf.mxu0
        %v511 = vadd.f32 0.0, %v510
        %v512 = vpop.f32.mrf.mxu0
        %513 = vmatprep.mubr.bf16.mxu0 0
        %514 = vmatmul.mubr.bf16.gmra.mxu0 %v324
        %v515 = vpop.f32.mrf.mxu0
        %v516 = vadd.f32 0.0, %v515
        %v517 = vpop.f32.mrf.mxu0
        %v518 = vpop.f32.mrf.mxu0
        %v519 = vadd.f32 0.0, %v518
        %v520 = vpop.f32.mrf.mxu0
        %521 = vmatprep.mubr.bf16.mxu0 0
        %522 = vmatmul.mubr.bf16.gmra.mxu0 %v325
        %v523 = vpop.f32.mrf.mxu0
        %v524 = vadd.f32 0.0, %v523
        %v525 = vpop.f32.mrf.mxu0
        %v526 = vpop.f32.mrf.mxu0
        %v527 = vadd.f32 0.0, %v526
        %v528 = vpop.f32.mrf.mxu0
        %529 = vmatprep.mubr.bf16.mxu0 0
        %530 = vmatmul.mubr.bf16.gmra.mxu0 %v326
        %v531 = vpop.f32.mrf.mxu0
        %v532 = vadd.f32 0.0, %v531
        %v533 = vpop.f32.mrf.mxu0
        %v534 = vpop.f32.mrf.mxu0
        %v535 = vadd.f32 0.0, %v534
        %v536 = vpop.f32.mrf.mxu0
        %537 = vmatprep.mubr.bf16.mxu0 0
        %538 = vmatmul.mubr.bf16.gmra.mxu0 %v327
        %v539 = vpop.f32.mrf.mxu0
        %v540 = vadd.f32 0.0, %v539
        %v541 = vpop.f32.mrf.mxu0
        %v542 = vpop.f32.mrf.mxu0
        %v543 = vadd.f32 0.0, %v542
        %v544 = vpop.f32.mrf.mxu0
        %545 = vmatprep.mubr.bf16.mxu0 0
        %546 = vmatmul.mubr.bf16.gmra.mxu0 %v328
        %v547 = vpop.f32.mrf.mxu0
        %v548 = vadd.f32 0.0, %v547
        %v549 = vpop.f32.mrf.mxu0
        %v550 = vpop.f32.mrf.mxu0
        %v551 = vadd.f32 0.0, %v550
        %v552 = vpop.f32.mrf.mxu0
        %553 = vdwg.mxu0
        %554 = vst [vmem:[%s197] sm:$0xff] %v428
        %555 = vst [vmem:[%s197 + $0x8] sm:$0xff] %v431
        %556 = vst [vmem:[%s197 + $0x10] sm:$0xff] %v436
        %557 = vst [vmem:[%s197 + $0x18] sm:$0xff] %v439
        %558 = vst [vmem:[%s197 + $0x20] sm:$0xff] %v444
        %559 = vst [vmem:[%s197 + $0x28] sm:$0xff] %v447
        %560 = vst [vmem:[%s197 + $0x30] sm:$0xff] %v452
        %561 = vst [vmem:[%s197 + $0x38] sm:$0xff] %v455
        %562 = vst [vmem:[%s197 + $0x40] sm:$0xff] %v460
        %563 = vst [vmem:[%s197 + $0x48] sm:$0xff] %v463
        %564 = vst [vmem:[%s197 + $0x50] sm:$0xff] %v468
        %565 = vst [vmem:[%s197 + $0x58] sm:$0xff] %v471
        %566 = vst [vmem:[%s197 + $0x60] sm:$0xff] %v476
        %567 = vst [vmem:[%s197 + $0x68] sm:$0xff] %v479
        %568 = vst [vmem:[%s197 + $0x70] sm:$0xff] %v484
        %569 = vst [vmem:[%s197 + $0x78] sm:$0xff] %v487
        %570 = vst [vmem:[%s197 + $0x80] sm:$0xff] %v492
        %571 = vst [vmem:[%s197 + $0x88] sm:$0xff] %v495
        %572 = vst [vmem:[%s197 + $0x90] sm:$0xff] %v500
        %573 = vst [vmem:[%s197 + $0x98] sm:$0xff] %v503
        %574 = vst [vmem:[%s197 + $0xa0] sm:$0xff] %v508
        %575 = vst [vmem:[%s197 + $0xa8] sm:$0xff] %v511
        %576 = vst [vmem:[%s197 + $0xb0] sm:$0xff] %v516
        %577 = vst [vmem:[%s197 + $0xb8] sm:$0xff] %v519
        %578 = vst [vmem:[%s197 + $0xc0] sm:$0xff] %v524
        %579 = vst [vmem:[%s197 + $0xc8] sm:$0xff] %v527
        %580 = vst [vmem:[%s197 + $0xd0] sm:$0xff] %v532
        %581 = vst [vmem:[%s197 + $0xd8] sm:$0xff] %v535
        %582 = vst [vmem:[%s197 + $0xe0] sm:$0xff] %v540
        %583 = vst [vmem:[%s197 + $0xe8] sm:$0xff] %v543
        %584 = vst [vmem:[%s197 + $0xf0] sm:$0xff] %v548
        %585 = vst [vmem:[%s197 + $0xf8] sm:$0xff] %v551
        %s586 = sand.u32 %s94, 1
        %s587 = scalar_lea.sflag [#allocation4], %s586
        %s588 = sand.u32 %s94, 1
        %s589 = smul.addr %s588, 256
        %s590 = scalar_lea.vmem [#allocation7], %s589
        // Predicated region
        $region37: #{tpu_custom_call.1} parent=27 // pred_check
          %p591 = pneg %p104
        $region38: #{tpu_custom_call.1} parent=27 // pred_check_branch
          %593 = sbr.rel (%p591) target = $region40
        $region39: #{tpu_custom_call.1} parent=27 // pred_region
          %s594 = smul.u32 32, %s24
          %s596 = ssub.s32 4096, 4096
          %597 = vsyncadd %s587, %s596
          %s598 = sadd.s32 %s25, %s594
          %s599 = smul.addr %s598, 128
          %s600 = scalar_lea.hbm %s2, %s599
          %s601 = sshll.u32 %s590, 4
          %s602 = int_to_ptr.vmem [resolvable:$true] %s601
          %607 = dma.vmem_to_hbm [thread:$0]  %s602, 4096, %s600, %s587, 128, 128, 8
        $region40: #{tpu_custom_call.1} parent=27 // pred_fallthru
          _
      $region28: #{tpu_custom_call.1} parent=5 // pred_fallthru
        _
      %p608 = scmp.le.s32.totalorder 2, %s15
      // Predicated region
      $region41: #{tpu_custom_call.1} parent=5 // pred_check
        %p609 = pneg %p608
      $region42: #{tpu_custom_call.1} parent=5 // pred_check_branch
        %611 = sbr.rel (%p609) target = $region44
      $region43: #{tpu_custom_call.1} parent=5 // pred_region
        %s612 = ssub.s32 %s15, 2
        // Predicated region
        $region45: #{tpu_custom_call.1} parent=43 // pred_check
          %p613 = pneg %p110
        $region46: #{tpu_custom_call.1} parent=43 // pred_check_branch
          %615 = sbr.rel (%p613) target = $region48
        $region47: #{tpu_custom_call.1} parent=43 // pred_region
          %s616 = sand.u32 %s95, 1
          %s617 = scalar_lea.sflag [#allocation4], %s616
          %s618 = sand.u32 %s95, 1
          %s619 = smul.addr %s618, 256
          %s620 = scalar_lea.vmem [#allocation7], %s619
          %621 = dma.done %s617, 4096
        $region48: #{tpu_custom_call.1} parent=43 // pred_fallthru
          _
      $region44: #{tpu_custom_call.1} parent=5 // pred_fallthru
        _
    $region6: #{tpu_custom_call.1} parent=1 // loop_footer
      %s19 = sadd.s32 1, %s15
    $region7: #{tpu_custom_call.1} parent=1 // loop_footer_branch
      %14 = sbr.rel target = $region3
    $region8: #{tpu_custom_call.1} parent=1 // loop_exit
      _
    %622 = vsyncpa [#allocation3], 1
    %s623 = scalar_lea.sflag [#allocation3], 1
    %624 = vsyncpa %s623, 1
    %625 = vsyncpa [#allocation6], 1
    %626 = vsyncpa [#allocation4], 1
    %s627 = scalar_lea.sflag [#allocation4], 1
    %628 = vsyncpa %s627, 1

</llo_original>
